<compile_context>
chip_gen: v5e
topology: v5e:2x2
jax: 0.10.0
libtpu: 0.0.40
codegen_flags: <defaults>
</compile_context>

<pallas_src>
import functools

import jax
import jax.numpy as jnp
from jax import lax
from jax.experimental import pallas as pl
from jax.experimental.pallas import tpu as pltpu


def _conv_tile(x_ref, w_ref, *, Wp, HWf):
    """3x3 'same' conv (no bias) for one batch tile.

    x_ref: (Cin_p, Lx)   flattened, spatially zero-padded input (row width Wp)
    w_ref: (Cout, 9*Cin_p)
    returns (Cout, HWf) f32: flattened output frame (row width Wp) on lanes.
    """
    taps = []
    for dy in range(3):
        for dx in range(3):
            off = dy * Wp + dx
            taps.append(x_ref[:, off:off + HWf])           # (Cin_p, HWf)
    # Cin_p is a sublane multiple -> concat is plain vreg stacking.
    patch = jnp.concatenate(taps, axis=0)                  # (9*Cin_p, HWf)
    # Single MXU matmul, K = 9*Cin_p, f32 accumulate.
    return jnp.dot(w_ref[...], patch, preferred_element_type=jnp.float32)


def _conv_stats_kernel(x_ref, w_ref, stats_ref, *, Wp, W, HWf):
    """Pass 1: conv (no bias) -> per-batch partial BN sums (no HBM conv out)."""
    y = _conv_tile(x_ref, w_ref, Wp=Wp, HWf=HWf)           # (Cout, HWf) f32
    # Valid-column mask built in-kernel (pad columns must not pollute stats).
    col = lax.broadcasted_iota(jnp.int32, (1, HWf), 1)
    mask = (col % Wp < W).astype(jnp.float32)              # (1, HWf)
    ym = y * mask
    psum = jnp.sum(ym, axis=1, keepdims=True)              # (Cout, 1)
    pssq = jnp.sum(ym * y, axis=1, keepdims=True)          # (Cout, 1)
    stats_ref[...] = jnp.concatenate([psum, pssq], axis=1)  # one (Cout, 2) store


def _conv_bn_relu_kernel(x_ref, w_ref, sc_ref, sh_ref, o_ref, *, Wp, HWf):
    """Pass 2: recompute conv, apply folded BN affine + ReLU, dense stores."""
    y = _conv_tile(x_ref, w_ref, Wp=Wp, HWf=HWf)           # (Cout, HWf)
    o_ref[...] = jnp.maximum(y * sc_ref[...] + sh_ref[...], 0.0)


def unit_forward(x_nchw, w_hwio, bias, gamma, beta, eps=1e-5,
                 mxu_dtype=jnp.float32):
    """Forward pass of `Unit`. x_nchw: (N, Cin, H, W) -> (N, Cout, H, W).

    mxu_dtype=jnp.bfloat16 is recommended on v6e/v7x when the consumer can
    tolerate bf16 conv operands (BN stats / affine / ReLU stay f32 either way).
    """
    N, Cin, H, W = x_nchw.shape
    KH, KW, _, Cout = w_hwio.shape
    assert (KH, KW) == (3, 3)

    # ---- layout plumbing: true-halo pad, sublane-aligned channels -----------
    sub = 16 if mxu_dtype == jnp.bfloat16 else 8
    Cin_p = -(-Cin // sub) * sub           # zero K-padding, free on the MXU
    Wp = W + 2                             # true column halo (no lane rounding)
    Hp = H + 3                             # top halo + bottom halo + 1 slack row
                                           # (keeps the flattened dy=2,dx=2 tap in bounds)
    HWf = H * Wp                           # flattened output-frame length (lanes)
    Lx = Hp * Wp

    # TODO(synk): replace this wrapper pad with an in-kernel zeroed VMEM
    # scratch filled by a manual make_async_copy of the unpadded block when
    # the ~1.33x input inflation ever matters (memory_space=pl.ANY path).
    x_pad = jnp.pad(x_nchw.astype(jnp.float32),
                    ((0, 0), (0, Cin_p - Cin), (1, 2), (1, 1)))
    x_flat = x_pad.reshape(N, Cin_p, Lx).astype(mxu_dtype)

    w_p = jnp.pad(w_hwio.astype(jnp.float32),
                  ((0, 0), (0, 0), (0, Cin_p - Cin), (0, 0)))   # (3,3,Cin_p,Cout)
    w_t = w_p.reshape(KH * KW * Cin_p, Cout).T.astype(mxu_dtype)  # (Cout, 9*Cin_p)

    # ---- VMEM budget from the actual blocks (inputs are double-buffered) ----
    esz = jnp.dtype(mxu_dtype).itemsize
    blk_x = Cin_p * Lx * esz
    blk_w = Cout * 9 * Cin_p * esz
    blk_o = Cout * HWf * 4
    patch = 9 * Cin_p * HWf * esz
    vmem_limit = int(min(100 << 20,
                         2 * (blk_x + blk_w + blk_o) + 2 * patch + 2 * blk_o
                         + (8 << 20)))
    cparams = pltpu.CompilerParams(dimension_semantics=("parallel",),
                                   vmem_limit_bytes=vmem_limit)
    # TODO(synk): for realistic H*W (v7x: 64 MiB VMEM, 2 TensorCores) add a
    # second, H-tiled grid axis with a 1-row halo window (manual DMA of the
    # overlapping window) and sum per-(n, h-tile) stat partials in the fold.

    # ---- pass 1: conv3x3 (no bias) -> per-batch BN partial sums -------------
    stats = pl.pallas_call(
        functools.partial(_conv_stats_kernel, Wp=Wp, W=W, HWf=HWf),
        out_shape=jax.ShapeDtypeStruct((N, Cout, 2), jnp.float32),
        grid=(N,),
        in_specs=[
            pl.BlockSpec((None, Cin_p, Lx), lambda n: (n, 0, 0)),
            pl.BlockSpec((Cout, KH * KW * Cin_p), lambda n: (0, 0)),
        ],
        out_specs=pl.BlockSpec((None, Cout, 2), lambda n: (n, 0, 0)),
        compiler_params=cparams,
    )(x_flat, w_t)

    # ---- stats fold: plain jnp (was a grid=(1,) pallas_call) ----------------
    count = float(N * H * W)
    s = jnp.sum(stats[:, :, 0], axis=0)        # (Cout,) sum of conv (no bias)
    ss = jnp.sum(stats[:, :, 1], axis=0)       # (Cout,) sum of conv^2
    mean_c = s / count
    var = ss / count - mean_c * mean_c         # biased (BN training), shift-invariant
    scale = gamma.astype(jnp.float32) * lax.rsqrt(var + eps)
    # y = conv + bias, mean_y = mean_c + bias, var_y = var_c  =>
    #   BN(y)*gamma+beta = scale*conv + (beta - scale*mean_c): the bias cancels
    # out of the training-mode forward (it only shifts BN running stats).
    shift = beta.astype(jnp.float32) - scale * mean_c
    del bias  # intentionally unused in the output path (see above)
    scale2 = scale.reshape(Cout, 1)
    shift2 = shift.reshape(Cout, 1)

    # ---- pass 2: conv recompute + folded BN affine + ReLU, dense stores -----
    y_frame = pl.pallas_call(
        functools.partial(_conv_bn_relu_kernel, Wp=Wp, HWf=HWf),
        out_shape=jax.ShapeDtypeStruct((N, Cout, HWf), jnp.float32),
        grid=(N,),
        in_specs=[
            pl.BlockSpec((None, Cin_p, Lx), lambda n: (n, 0, 0)),
            pl.BlockSpec((Cout, KH * KW * Cin_p), lambda n: (0, 0)),
            pl.BlockSpec((Cout, 1), lambda n: (0, 0)),
            pl.BlockSpec((Cout, 1), lambda n: (0, 0)),
        ],
        out_specs=pl.BlockSpec((None, Cout, HWf), lambda n: (n, 0, 0)),
        compiler_params=cparams,
    )(x_flat, w_t, scale2, shift2)

    # W < 128: keep the lane-dense padded frame in the kernel and de-pad once
    # here (masked narrow stores would be worse, esp. on v5e's single vst slot).
    # TODO(synk): when W >= 128, store compact (Cout, H, W) rows in-kernel and
    # drop this slice (it is an extra HBM read+write of the output).
    return y_frame.reshape(N, Cout, H, Wp)[:, :, :, :W]


def unit_reference(x_nchw, w_hwio, bias, gamma, beta, eps=1e-5):
    """Pure-JAX reference with identical semantics (for correctness check)."""
    x = jnp.transpose(x_nchw, (0, 2, 3, 1)).astype(jnp.float32)
    y = lax.conv_general_dilated(
        x, w_hwio.astype(jnp.float32), window_strides=(1, 1), padding="SAME",
        dimension_numbers=("NHWC", "HWIO", "NHWC")) + bias
    mean = y.mean(axis=(0, 1, 2))
    var = ((y - mean) ** 2).mean(axis=(0, 1, 2))            # biased, like BN train
    yb = (y - mean) * lax.rsqrt(var + eps) * gamma + beta
    return jnp.transpose(jnp.maximum(yb, 0.0), (0, 3, 1, 2))


if __name__ == "__main__":
    # Small shapes consistent with Unit(in_channels=4, out_channels=8).
    N, Cin, Cout, H, W = 2, 4, 8, 16, 16

    key = jax.random.PRNGKey(0)
    kx, kw, kb, kg, kbe = jax.random.split(key, 5)
    x = jax.random.normal(kx, (N, Cin, H, W), jnp.float32)          # NCHW input
    w_hwio = jax.random.normal(kw, (3, 3, Cin, Cout), jnp.float32) * 0.1
    bias = jax.random.normal(kb, (Cout,), jnp.float32) * 0.1
    gamma = 1.0 + 0.1 * jax.random.normal(kg, (Cout,), jnp.float32)
    beta = 0.1 * jax.random.normal(kbe, (Cout,), jnp.float32)

    out = jax.block_until_ready(unit_forward(x, w_hwio, bias, gamma, beta))
    ref = jax.block_until_ready(unit_reference(x, w_hwio, bias, gamma, beta))

    assert out.shape == (N, Cout, H, W), out.shape
    if not jnp.allclose(out, ref, rtol=1e-4, atol=1e-4):
        raise AssertionError(
            f"mismatch: max abs err = {jnp.max(jnp.abs(out - ref))}")
    print("KERNEL_OK")
</pallas_src>

<mosaic_0001>
module attributes {stable_mosaic.version = 11 : i64} {
  func.func @_conv_stats_kernel(%arg0: i32, %arg1: memref<1x8x342xf32, #tpu.memory_space<vmem>>, %arg2: memref<8x72xf32, #tpu.memory_space<vmem>>, %arg3: memref<1x8x2xf32, #tpu.memory_space<vmem>>) attributes {dimension_semantics = [#tpu.dimension_semantics<parallel>], iteration_bounds = array<i64: 2>, scalar_prefetch = 0 : i64, scratch_operands = 0 : i64, tpu.core_type = #tpu.core_type<tc>, window_params = [{transform_indices = @transform_0, window_bounds = array<i64: 1, 8, 342>}, {pipeline_mode = #tpu.pipeline_mode<synchronous>, transform_indices = @transform_1, window_bounds = array<i64: 8, 72>}, {transform_indices = @transform_2, window_bounds = array<i64: 1, 8, 2>}]} {
    %c0 = arith.constant 0 : index
    %c0_0 = arith.constant 0 : index
    %c0_1 = arith.constant 0 : index
    %0 = vector.load %arg1[%c0, %c0_0, %c0_1] : memref<1x8x342xf32, #tpu.memory_space<vmem>>, vector<1x8x288xf32>
    %1 = vector.shape_cast %0 : vector<1x8x288xf32> to vector<8x288xf32>
    %c0_2 = arith.constant 0 : index
    %c0_3 = arith.constant 0 : index
    %c1 = arith.constant 1 : index
    %2 = vector.load %arg1[%c0_2, %c0_3, %c1] : memref<1x8x342xf32, #tpu.memory_space<vmem>>, vector<1x8x288xf32>
    %3 = vector.shape_cast %2 : vector<1x8x288xf32> to vector<8x288xf32>
    %c0_4 = arith.constant 0 : index
    %c0_5 = arith.constant 0 : index
    %c2 = arith.constant 2 : index
    %4 = vector.load %arg1[%c0_4, %c0_5, %c2] : memref<1x8x342xf32, #tpu.memory_space<vmem>>, vector<1x8x288xf32>
    %5 = vector.shape_cast %4 : vector<1x8x288xf32> to vector<8x288xf32>
    %c0_6 = arith.constant 0 : index
    %c0_7 = arith.constant 0 : index
    %c18 = arith.constant 18 : index
    %6 = vector.load %arg1[%c0_6, %c0_7, %c18] : memref<1x8x342xf32, #tpu.memory_space<vmem>>, vector<1x8x288xf32>
    %7 = vector.shape_cast %6 : vector<1x8x288xf32> to vector<8x288xf32>
    %c0_8 = arith.constant 0 : index
    %c0_9 = arith.constant 0 : index
    %c19 = arith.constant 19 : index
    %8 = vector.load %arg1[%c0_8, %c0_9, %c19] : memref<1x8x342xf32, #tpu.memory_space<vmem>>, vector<1x8x288xf32>
    %9 = vector.shape_cast %8 : vector<1x8x288xf32> to vector<8x288xf32>
    %c0_10 = arith.constant 0 : index
    %c0_11 = arith.constant 0 : index
    %c20 = arith.constant 20 : index
    %10 = vector.load %arg1[%c0_10, %c0_11, %c20] : memref<1x8x342xf32, #tpu.memory_space<vmem>>, vector<1x8x288xf32>
    %11 = vector.shape_cast %10 : vector<1x8x288xf32> to vector<8x288xf32>
    %c0_12 = arith.constant 0 : index
    %c0_13 = arith.constant 0 : index
    %c36 = arith.constant 36 : index
    %12 = vector.load %arg1[%c0_12, %c0_13, %c36] : memref<1x8x342xf32, #tpu.memory_space<vmem>>, vector<1x8x288xf32>
    %13 = vector.shape_cast %12 : vector<1x8x288xf32> to vector<8x288xf32>
    %c0_14 = arith.constant 0 : index
    %c0_15 = arith.constant 0 : index
    %c37 = arith.constant 37 : index
    %14 = vector.load %arg1[%c0_14, %c0_15, %c37] : memref<1x8x342xf32, #tpu.memory_space<vmem>>, vector<1x8x288xf32>
    %15 = vector.shape_cast %14 : vector<1x8x288xf32> to vector<8x288xf32>
    %c0_16 = arith.constant 0 : index
    %c0_17 = arith.constant 0 : index
    %c38 = arith.constant 38 : index
    %16 = vector.load %arg1[%c0_16, %c0_17, %c38] : memref<1x8x342xf32, #tpu.memory_space<vmem>>, vector<1x8x288xf32>
    %17 = vector.shape_cast %16 : vector<1x8x288xf32> to vector<8x288xf32>
    %18 = tpu.concatenate %1, %3, %5, %7, %9, %11, %13, %15, %17 in 0 : vector<8x288xf32>, vector<8x288xf32>, vector<8x288xf32>, vector<8x288xf32>, vector<8x288xf32>, vector<8x288xf32>, vector<8x288xf32>, vector<8x288xf32>, vector<8x288xf32> -> vector<72x288xf32>
    %c0_18 = arith.constant 0 : index
    %c0_19 = arith.constant 0 : index
    %19 = vector.load %arg2[%c0_18, %c0_19] : memref<8x72xf32, #tpu.memory_space<vmem>>, vector<8x72xf32>
    %cst = arith.constant dense<0.000000e+00> : vector<8x288xf32>
    %20 = tpu.matmul %19, %18, %cst {dimension_numbers = #tpu.dot_dimension_numbers<[1], [0], [0], [1], [0, 0, 1, 1], [], []>} : vector<8x72xf32>, vector<72x288xf32>, vector<8x288xf32> -> vector<8x288xf32>
    %21 = tpu.iota {dimensions = array<i32: 1>} : vector<1x288xi32>
    %c18_i32 = arith.constant 18 : i32
    %c0_i32 = arith.constant 0 : i32
    %22 = arith.cmpi eq, %c18_i32, %c0_i32 : i32
    %c1_i32 = arith.constant 1 : i32
    %23 = arith.select %22, %c1_i32, %c18_i32 : i32
    %24 = vector.broadcast %23 : i32 to vector<1x288xi32>
    %25 = arith.remsi %21, %24 : vector<1x288xi32>
    %c0_i32_20 = arith.constant 0 : i32
    %26 = vector.broadcast %c0_i32_20 : i32 to vector<1x288xi32>
    %27 = arith.cmpi ne, %25, %26 : vector<1x288xi32>
    %c0_i32_21 = arith.constant 0 : i32
    %28 = vector.broadcast %c0_i32_21 : i32 to vector<1x288xi32>
    %29 = arith.cmpi slt, %25, %28 : vector<1x288xi32>
    %c0_i32_22 = arith.constant 0 : i32
    %30 = arith.cmpi slt, %23, %c0_i32_22 : i32
    %31 = vector.broadcast %30 : i1 to vector<1x288xi1>
    %32 = vector.broadcast %31 : vector<1x288xi1> to vector<1x288xi1>
    %33 = arith.xori %29, %32 : vector<1x288xi1>
    %34 = arith.andi %33, %27 : vector<1x288xi1>
    %35 = vector.broadcast %23 : i32 to vector<1x288xi32>
    %36 = arith.addi %25, %35 : vector<1x288xi32>
    %37 = arith.select %34, %36, %25 : vector<1x288xi1>, vector<1x288xi32>
    %c16_i32 = arith.constant 16 : i32
    %38 = vector.broadcast %c16_i32 : i32 to vector<1x288xi32>
    %39 = arith.cmpi slt, %37, %38 : vector<1x288xi32>
    %40 = arith.extui %39 : vector<1x288xi1> to vector<1x288xi32>
    %41 = arith.sitofp %40 : vector<1x288xi32> to vector<1x288xf32>
    %42 = vector.broadcast %41 : vector<1x288xf32> to vector<8x288xf32>
    %43 = arith.mulf %20, %42 : vector<8x288xf32>
    %cst_23 = arith.constant dense<0.000000e+00> : vector<8xf32>
    %44 = vector.multi_reduction <add>, %43, %cst_23 [1] : vector<8x288xf32> to vector<8xf32>
    %45 = vector.shape_cast %44 : vector<8xf32> to vector<8x1xf32>
    %46 = arith.mulf %43, %20 : vector<8x288xf32>
    %cst_24 = arith.constant dense<0.000000e+00> : vector<8xf32>
    %47 = vector.multi_reduction <add>, %46, %cst_24 [1] : vector<8x288xf32> to vector<8xf32>
    %48 = vector.shape_cast %47 : vector<8xf32> to vector<8x1xf32>
    %49 = tpu.concatenate %45, %48 in 1 : vector<8x1xf32>, vector<8x1xf32> -> vector<8x2xf32>
    %c0_25 = arith.constant 0 : index
    %c0_26 = arith.constant 0 : index
    %c0_27 = arith.constant 0 : index
    %50 = vector.load %arg3[%c0_25, %c0_26, %c0_27] : memref<1x8x2xf32, #tpu.memory_space<vmem>>, vector<1x8x2xf32>
    %51 = vector.shape_cast %50 : vector<1x8x2xf32> to vector<8x2xf32>
    %52 = vector.shape_cast %49 : vector<8x2xf32> to vector<1x8x2xf32>
    tpu.vector_store %arg3[%c0_25, %c0_26, %c0_27], %52 {strides = array<i32>} : memref<1x8x2xf32, #tpu.memory_space<vmem>>, vector<1x8x2xf32>,
    return
  }
  func.func @transform_0(%arg0: i32) -> (i32, i32, i32) {
    %c0_i32 = arith.constant 0 : i32
    %c0_i32_0 = arith.constant 0 : i32
    %c0_i32_1 = arith.constant 0 : i32
    return %arg0, %c0_i32, %c0_i32_0 : i32, i32, i32
  }
  func.func @transform_1(%arg0: i32) -> (i32, i32) {
    %c0_i32 = arith.constant 0 : i32
    %c0_i32_0 = arith.constant 0 : i32
    %c0_i32_1 = arith.constant 0 : i32
    return %c0_i32, %c0_i32_0 : i32, i32
  }
  func.func @transform_2(%arg0: i32) -> (i32, i32, i32) {
    %c0_i32 = arith.constant 0 : i32
    %c0_i32_0 = arith.constant 0 : i32
    %c0_i32_1 = arith.constant 0 : i32
    return %arg0, %c0_i32, %c0_i32_0 : i32, i32, i32
  }
}

</mosaic_0001>

<llo_original>
// kernel: tpu_custom_call.1
$region0: #{tpu_custom_call.1}
  #allocation0 [shape = 'u32[]', space=smem, size = 0x4, offset = 0x4, fixed_abs, tag = 'smem constant byte address 0x4 - core index']
  #allocation1 [shape = 'u32[72,128]{1,0:T(1,128)}', space=vmem, size = 0x9000, scoped, tag = 'internal scratch']
  %s0 = inlined_call_operand.hbm [shape: f32[2,8,342], index: 0, kind: input, shape index: {}]
  %s1 = inlined_call_operand.hbm [shape: f32[8,72], index: 1, kind: input, shape index: {}]
  %s2 = inlined_call_operand.vmem [shape: f32[2,8,2], index: 2, kind: output, shape index: {}]
  %s3 = sld [smem:[#allocation0]]
  $region49: #{tpu_custom_call.1} parent=0
    _
  %s5 = ssub.s32 1, %s3
  %s6 = scalar_select 0, %s5, %s3
  $region1: #{tpu_custom_call.1} parent=0
    #allocation2 [shape = 'u8[24576]{0}', space=vmem, size = 0x6000, scoped, tag = 'input window, operand 0']
    #allocation3 [shape = 's32[2]{0}', space=sflag, size = 0x8, scoped, tag = 'scoped memory for tpu_custom_call.1']
    #allocation4 [shape = 'u8[4096]{0}', space=vmem, size = 0x1000, scoped, tag = 'input window, operand 1, single buffered']
    #allocation5 [shape = 's32[1]{0}', space=sflag, size = 0x4, scoped, tag = 'scoped memory for tpu_custom_call.1']
    %7 = vsyncpa [#allocation3], 0
    %s8 = scalar_lea.sflag [#allocation3], 1
    %9 = vsyncpa %s8, 0
    %10 = vsyncpa [#allocation5], 0
    loop: start=0, step=1, limit=4
    $region2: #{tpu_custom_call.1} parent=1 // loop_pre_header
      _
    $region3: #{tpu_custom_call.1} parent=1 // loop_header
      %s12 = sphi 0, %s16
      %p13 = scmp.ge.s32.totalorder %s12, 4
      %s22 = sphi 0, %s24
      %s25 = sphi 0, %s22
      %s26 = sphi 0, %s25
      %s42 = sphi 0, %s26
      %s46 = sphi 0, %s46
      %s48 = sphi 0, %s46
      %s49 = sphi 0, %s48
      %s63 = sphi 0, %s49
      %s69 = sphi 0, %s71
      %s72 = sphi 0, %s69
      %s73 = sphi 0, %s72
      %s89 = sphi 0, %s73
    $region4: #{tpu_custom_call.1} parent=1 // loop_header_branch
      %15 = sbr.rel (%p13) target = $region8
    $region5: #{tpu_custom_call.1} parent=1 // loop_body
      %s17 = ssub.s32 %s12, 1
      %s18 = ssub.s32 %s12, 2
      %s19 = sadd.s32 %s12, 1
      %s20 = ssub.s32 %s12, %s19
      %p21 = scmp.eq.s32.totalorder %s20, 0
      %s23 = sadd.s32 %s22, 1
      %s24 = scalar_select %p21, %s22, %s23
      %p27 = pneg %p21
      %p28 = scmp.eq.s32.totalorder %s12, 1
      %p29 = por %p27, %p28
      %p30 = scmp.ne.s32.totalorder %s22, %s25
      %p31 = scmp.eq.s32.totalorder %s12, 0
      %p32 = por %p30, %p31
      %p33 = scmp.ne.s32.totalorder %s22, %s25
      %p34 = scmp.eq.s32.totalorder %s17, 1
      %p35 = por %p33, %p34
      %p36 = scmp.ne.s32.totalorder %s25, %s26
      %p37 = scmp.eq.s32.totalorder %s17, 0
      %p38 = por %p36, %p37
      %p39 = scmp.ne.s32.totalorder %s25, %s26
      %p40 = scmp.eq.s32.totalorder %s18, 1
      %p41 = por %p39, %p40
      %p43 = scmp.ne.s32.totalorder %s26, %s42
      %p44 = scmp.eq.s32.totalorder %s18, 0
      %p45 = por %p43, %p44
      %s47 = sadd.s32 %s46, 1
      %p50 = scmp.eq.s32.totalorder %s12, 1
      %p51 = scmp.ne.s32.totalorder %s46, %s48
      %p52 = scmp.eq.s32.totalorder %s12, 0
      %p53 = por %p51, %p52
      %p54 = scmp.ne.s32.totalorder %s46, %s48
      %p55 = scmp.eq.s32.totalorder %s17, 1
      %p56 = por %p54, %p55
      %p57 = scmp.ne.s32.totalorder %s48, %s49
      %p58 = scmp.eq.s32.totalorder %s17, 0
      %p59 = por %p57, %p58
      %p60 = scmp.ne.s32.totalorder %s48, %s49
      %p61 = scmp.eq.s32.totalorder %s18, 1
      %p62 = por %p60, %p61
      %p64 = scmp.ne.s32.totalorder %s49, %s63
      %p65 = scmp.eq.s32.totalorder %s18, 0
      %p66 = por %p64, %p65
      %s67 = ssub.s32 %s12, %s19
      %p68 = scmp.eq.s32.totalorder %s67, 0
      %s70 = sadd.s32 %s69, 1
      %s71 = scalar_select %p68, %s69, %s70
      %p74 = pneg %p68
      %p75 = scmp.eq.s32.totalorder %s12, 1
      %p76 = por %p74, %p75
      %p77 = scmp.ne.s32.totalorder %s69, %s72
      %p78 = scmp.eq.s32.totalorder %s12, 0
      %p79 = por %p77, %p78
      %p80 = scmp.ne.s32.totalorder %s69, %s72
      %p81 = scmp.eq.s32.totalorder %s17, 1
      %p82 = por %p80, %p81
      %p83 = scmp.ne.s32.totalorder %s72, %s73
      %p84 = scmp.eq.s32.totalorder %s17, 0
      %p85 = por %p83, %p84
      %p86 = scmp.ne.s32.totalorder %s72, %s73
      %p87 = scmp.eq.s32.totalorder %s18, 1
      %p88 = por %p86, %p87
      %p90 = scmp.ne.s32.totalorder %s73, %s89
      %p91 = scmp.eq.s32.totalorder %s18, 0
      %p92 = por %p90, %p91
      %p93 = scmp.le.s32.totalorder 1, %s12
      %p94 = scmp.lt.s32.totalorder %s12, 3
      %p95 = pnand %p93, %p94
      %p96 = pneg %p95
      // Predicated region
      $region9: #{tpu_custom_call.1} parent=5 // pred_check
        _
      $region10: #{tpu_custom_call.1} parent=5 // pred_check_branch
        %98 = sbr.rel (%p95) target = $region12
      $region11: #{tpu_custom_call.1} parent=5 // pred_region
        %s99 = ssub.s32 %s12, 1
        // Predicated region
        $region13: #{tpu_custom_call.1} parent=11 // pred_check
          %p100 = pneg %p59
        $region14: #{tpu_custom_call.1} parent=11 // pred_check_branch
          %102 = sbr.rel (%p100) target = $region16
        $region15: #{tpu_custom_call.1} parent=11 // pred_region
          %104 = vsyncadd [#allocation5], 0
          %s106 = sshll.u32 %s1, 4
          %s107 = int_to_ptr.hbm [resolvable:$true] %s106
          %s108 = sshll.u32 [#allocation4], 4
          %s109 = int_to_ptr.vmem [resolvable:$true] %s108
          %111 = dma.hbm_to_vmem [thread:$0]  %s107, 128, %s109, [#allocation5]
        $region16: #{tpu_custom_call.1} parent=11 // pred_fallthru
          _
      $region12: #{tpu_custom_call.1} parent=5 // pred_fallthru
        _
      %p112 = scmp.lt.s32.totalorder %s12, 2
      // Predicated region
      $region17: #{tpu_custom_call.1} parent=5 // pred_check
        %p113 = pneg %p112
      $region18: #{tpu_custom_call.1} parent=5 // pred_check_branch
        %115 = sbr.rel (%p113) target = $region20
      $region19: #{tpu_custom_call.1} parent=5 // pred_region
        // Predicated region
        $region21: #{tpu_custom_call.1} parent=19 // pred_check
          %p116 = pneg %p32
        $region22: #{tpu_custom_call.1} parent=19 // pred_check_branch
          %118 = sbr.rel (%p116) target = $region24
        $region23: #{tpu_custom_call.1} parent=19 // pred_region
          %s119 = sand.u32 %s22, 1
          %s120 = scalar_lea.sflag [#allocation3], %s119
          %s121 = sand.u32 %s22, 1
          %s122 = smul.addr %s121, 24
          %s123 = scalar_lea.vmem [#allocation2], %s122
          %125 = vsyncadd %s120, 0
          %s126 = smul.addr %s12, 3
          %s127 = smul.addr %s126, 8
          %s128 = scalar_lea.hbm %s0, %s127
          %s130 = sshll.u32 %s128, 4
          %s131 = int_to_ptr.hbm [resolvable:$true] %s130
          %s132 = sshll.u32 %s123, 4
          %s133 = int_to_ptr.vmem [resolvable:$true] %s132
          %135 = dma.hbm_to_vmem [thread:$0]  %s131, 384, %s133, %s120
        $region24: #{tpu_custom_call.1} parent=19 // pred_fallthru
          _
      $region20: #{tpu_custom_call.1} parent=5 // pred_fallthru
        _
      %p136 = scmp.le.s32.totalorder 1, %s12
      %p137 = scmp.lt.s32.totalorder %s12, 3
      %p138 = pnand %p136, %p137
      %p139 = pneg %p138
      // Predicated region
      $region25: #{tpu_custom_call.1} parent=5 // pred_check
        _
      $region26: #{tpu_custom_call.1} parent=5 // pred_check_branch
        %141 = sbr.rel (%p138) target = $region28
      $region27: #{tpu_custom_call.1} parent=5 // pred_region
        %s142 = ssub.s32 %s12, 1
        %s143 = sand.u32 %s25, 1
        %s144 = scalar_lea.sflag [#allocation3], %s143
        %s145 = sand.u32 %s25, 1
        %s146 = smul.addr %s145, 24
        %s147 = scalar_lea.vmem [#allocation2], %s146
        // Predicated region
        $region29: #{tpu_custom_call.1} parent=27 // pred_check
          %p148 = pneg %p38
        $region30: #{tpu_custom_call.1} parent=27 // pred_check_branch
          %150 = sbr.rel (%p148) target = $region32
        $region31: #{tpu_custom_call.1} parent=27 // pred_region
          %152 = dma.done %s144, 384
        $region32: #{tpu_custom_call.1} parent=27 // pred_fallthru
          _
        // Predicated region
        $region33: #{tpu_custom_call.1} parent=27 // pred_check
          %p153 = pneg %p59
        $region34: #{tpu_custom_call.1} parent=27 // pred_check_branch
          %155 = sbr.rel (%p153) target = $region36
        $region35: #{tpu_custom_call.1} parent=27 // pred_region
          %157 = dma.done [#allocation5], 128
        $region36: #{tpu_custom_call.1} parent=27 // pred_fallthru
          _
        %s158 = sand.u32 %s25, 1
        %s159 = scalar_lea.sflag [#allocation3], %s158
        %s160 = sand.u32 %s25, 1
        %s161 = smul.addr %s160, 24
        %s162 = scalar_lea.vmem [#allocation2], %s161
        %p163 = pneg %p38
        %p164 = pneg %p35
        %p165 = pneg %p59
        %p166 = pneg %p56
        %p167 = pneg %p85
        %p168 = pneg %p82
        %p169 = scmp.lt.s32.totalorder %s17, 1
        %s170 = scalar_select %p169, %s17, 1
        %s171 = smul.addr %s170, 8
        %s172 = scalar_lea.vmem %s2, %s171
        %p173 = scmp.lt.s32.totalorder %s17, 1
        %s174 = scalar_select %p173, %s17, 1
        %s175 = smul.addr %s174, 8
        %s176 = scalar_lea.vmem %s2, %s175
        %v177 = vld [vmem:[%s147] sm:$0xff]
        %v178 = vld [vmem:[%s147 + $0x8] sm:$0xff]
        %v179 = vld [vmem:[%s147 + $0x10] sm:$0xff]
        %183 = vrot.lane.b32.xlu0 %v177, 127
        %v184 = vpop.permute.xlu0 %183
        %185 = vrot.lane.b32.xlu0 %v178, 127
        %v186 = vpop.permute.xlu0 %185
        %187 = vrot.lane.b32.xlu0 %v179, 127
        %v188 = vpop.permute.xlu0 %187
        %vm189 = vcmask 1039360
        %v190 = vsel %vm189, %v184, %v186
        %v191 = vsel %vm189, %v186, %v188
        %195 = vrot.lane.b32.xlu0 %v177, 126
        %v196 = vpop.permute.xlu0 %195
        %197 = vrot.lane.b32.xlu0 %v178, 126
        %v198 = vpop.permute.xlu0 %197
        %199 = vrot.lane.b32.xlu0 %v179, 126
        %v200 = vpop.permute.xlu0 %199
        %vm201 = vcmask 1031168
        %v202 = vsel %vm201, %v196, %v198
        %v203 = vsel %vm201, %v198, %v200
        %207 = vrot.lane.b32.xlu0 %v177, 110
        %v208 = vpop.permute.xlu0 %207
        %209 = vrot.lane.b32.xlu0 %v178, 110
        %v210 = vpop.permute.xlu0 %209
        %211 = vrot.lane.b32.xlu0 %v179, 110
        %v212 = vpop.permute.xlu0 %211
        %vm213 = vcmask 900096
        %v214 = vsel %vm213, %v208, %v210
        %v215 = vsel %vm213, %v210, %v212
        %219 = vrot.lane.b32.xlu0 %v177, 109
        %v220 = vpop.permute.xlu0 %219
        %221 = vrot.lane.b32.xlu0 %v178, 109
        %v222 = vpop.permute.xlu0 %221
        %223 = vrot.lane.b32.xlu0 %v179, 109
        %v224 = vpop.permute.xlu0 %223
        %vm225 = vcmask 891904
        %v226 = vsel %vm225, %v220, %v222
        %v227 = vsel %vm225, %v222, %v224
        %231 = vrot.lane.b32.xlu0 %v177, 108
        %v232 = vpop.permute.xlu0 %231
        %233 = vrot.lane.b32.xlu0 %v178, 108
        %v234 = vpop.permute.xlu0 %233
        %235 = vrot.lane.b32.xlu0 %v179, 108
        %v236 = vpop.permute.xlu0 %235
        %vm237 = vcmask 883712
        %v238 = vsel %vm237, %v232, %v234
        %v239 = vsel %vm237, %v234, %v236
        %243 = vrot.lane.b32.xlu0 %v177, 92
        %v244 = vpop.permute.xlu0 %243
        %245 = vrot.lane.b32.xlu0 %v178, 92
        %v246 = vpop.permute.xlu0 %245
        %247 = vrot.lane.b32.xlu0 %v179, 92
        %v248 = vpop.permute.xlu0 %247
        %vm249 = vcmask 752640
        %v250 = vsel %vm249, %v244, %v246
        %v251 = vsel %vm249, %v246, %v248
        %255 = vrot.lane.b32.xlu0 %v177, 91
        %v256 = vpop.permute.xlu0 %255
        %257 = vrot.lane.b32.xlu0 %v178, 91
        %v258 = vpop.permute.xlu0 %257
        %259 = vrot.lane.b32.xlu0 %v179, 91
        %v260 = vpop.permute.xlu0 %259
        %vm261 = vcmask 744448
        %v262 = vsel %vm261, %v256, %v258
        %v263 = vsel %vm261, %v258, %v260
        %267 = vrot.lane.b32.xlu0 %v177, 90
        %v268 = vpop.permute.xlu0 %267
        %269 = vrot.lane.b32.xlu0 %v178, 90
        %v270 = vpop.permute.xlu0 %269
        %271 = vrot.lane.b32.xlu0 %v179, 90
        %v272 = vpop.permute.xlu0 %271
        %vm273 = vcmask 736256
        %v274 = vsel %vm273, %v268, %v270
        %v275 = vsel %vm273, %v270, %v272
        %v279 = vld [vmem:[#allocation4] sm:$0xff]
        %vm280 = vcmask 588800
        %v282 = vsel %vm280, %v279, 0
        %284 = vmatpush.msra.mxu0 0.0
        %285 = vmatpush.msra.mxu0 0.0
        %286 = vmatpush.msra.mxu0 0.0
        %287 = vmatpush.msra.mxu0 0.0
        %288 = vmatpush.msra.mxu0 0.0
        %289 = vmatpush.msra.mxu0 0.0
        %290 = vmatpush.msra.mxu0 0.0
        %291 = vmatpush.msra.mxu0 %v274
        %292 = vmatpush.msra.mxu0 %v262
        %293 = vmatpush.msra.mxu0 %v250
        %294 = vmatpush.msra.mxu0 %v238
        %295 = vmatpush.msra.mxu0 %v226
        %296 = vmatpush.msra.mxu0 %v214
        %297 = vmatpush.msra.mxu0 %v202
        %298 = vmatpush.msra.mxu0 %v190
        %299 = vmatpush.msra.mxu0 %v177
        %300 = vmatmul.f32.gmra.mxu0 %v282
        %v301 = vpop.f32.mrf.mxu0
        %v302 = vadd.f32 0.0, %v301
        %303 = vdwg.mxu0
        %304 = vmatpush.msra.mxu0 0.0
        %305 = vmatpush.msra.mxu0 0.0
        %306 = vmatpush.msra.mxu0 0.0
        %307 = vmatpush.msra.mxu0 0.0
        %308 = vmatpush.msra.mxu0 0.0
        %309 = vmatpush.msra.mxu0 0.0
        %310 = vmatpush.msra.mxu0 0.0
        %311 = vmatpush.msra.mxu0 %v275
        %312 = vmatpush.msra.mxu0 %v263
        %313 = vmatpush.msra.mxu0 %v251
        %314 = vmatpush.msra.mxu0 %v239
        %315 = vmatpush.msra.mxu0 %v227
        %316 = vmatpush.msra.mxu0 %v215
        %317 = vmatpush.msra.mxu0 %v203
        %318 = vmatpush.msra.mxu0 %v191
        %319 = vmatpush.msra.mxu0 %v178
        %320 = vmatmul.f32.gmra.mxu0 %v282
        %v321 = vpop.f32.mrf.mxu0
        %v322 = vadd.f32 0.0, %v321
        %323 = vdwg.mxu0
        %324 = vmatpush.msra.mxu0 0.0
        %325 = vmatpush.msra.mxu0 0.0
        %326 = vmatpush.msra.mxu0 0.0
        %327 = vmatpush.msra.mxu0 0.0
        %328 = vmatpush.msra.mxu0 0.0
        %329 = vmatpush.msra.mxu0 0.0
        %330 = vmatpush.msra.mxu0 0.0
        %331 = vmatpush.msra.mxu0 %v272
        %332 = vmatpush.msra.mxu0 %v260
        %333 = vmatpush.msra.mxu0 %v248
        %334 = vmatpush.msra.mxu0 %v236
        %335 = vmatpush.msra.mxu0 %v224
        %336 = vmatpush.msra.mxu0 %v212
        %337 = vmatpush.msra.mxu0 %v200
        %338 = vmatpush.msra.mxu0 %v188
        %339 = vmatpush.msra.mxu0 %v179
        %340 = vmatmul.f32.gmra.mxu0 %v282
        %v341 = vpop.f32.mrf.mxu0
        %v342 = vadd.f32 0.0, %v341
        %343 = vdwg.mxu0
        %v344 = vlaneseq
        %v345 = vand.u32 %v344, 127
        %v346 = vadd.s32 %v345, 128
        %v347 = vadd.s32 %v345, 256
        %vm348 = vcmp.lt.s32.totalorder %v345, 0
        %v349 = vsub.s32 0, %v345
        %v350 = vsel %vm348, %v349, %v345
        %v351 = vand.u32 %v350, 65535
        %v352 = vshrl.u32 %v350, 16
        %v354 = vmul.u32 %v351, 14564
        %v355 = vmul.u32 %v351, 58254
        %v356 = vmul.u32 %v352, 14564
        %v357 = vmul.u32 %v352, 58254
        %v358 = vshll.u32 %v355, 16
        %v359 = vshrl.u32 %v355, 16
        %v360 = vshll.u32 %v356, 16
        %v361 = vshrl.u32 %v356, 16
        %vm362 = vc.u32 %v354, %v358
        %v363 = vsel %vm362, 1, 0
        %v364 = vadd.s32 %v354, %v358
        %v365 = vadd.s32 %v357, %v363
        %vm366 = vc.u32 %v364, %v360
        %v367 = vsel %vm366, 1, 0
        %v368 = vadd.s32 %v364, %v360
        %v369 = vadd.s32 %v365, %v367
        %v370 = vadd.s32 %v369, %v359
        %v371 = vadd.s32 %v370, %v361
        %v372 = vshrl.u32 %v371, 4
        %v373 = vmul.u32 %v372, 18
        %v374 = vsub.s32 %v350, %v373
        %v375 = vsub.s32 0, %v374
        %v376 = vsel %vm348, %v375, %v374
        %vm377 = vcmp.lt.s32.totalorder %v346, 0
        %v378 = vsub.s32 0, %v346
        %v379 = vsel %vm377, %v378, %v346
        %v380 = vand.u32 %v379, 65535
        %v381 = vshrl.u32 %v379, 16
        %v383 = vmul.u32 %v380, 14564
        %v384 = vmul.u32 %v380, 58254
        %v385 = vmul.u32 %v381, 14564
        %v386 = vmul.u32 %v381, 58254
        %v387 = vshll.u32 %v384, 16
        %v388 = vshrl.u32 %v384, 16
        %v389 = vshll.u32 %v385, 16
        %v390 = vshrl.u32 %v385, 16
        %vm391 = vc.u32 %v383, %v387
        %v392 = vsel %vm391, 1, 0
        %v393 = vadd.s32 %v383, %v387
        %v394 = vadd.s32 %v386, %v392
        %vm395 = vc.u32 %v393, %v389
        %v396 = vsel %vm395, 1, 0
        %v397 = vadd.s32 %v393, %v389
        %v398 = vadd.s32 %v394, %v396
        %v399 = vadd.s32 %v398, %v388
        %v400 = vadd.s32 %v399, %v390
        %v401 = vshrl.u32 %v400, 4
        %v402 = vmul.u32 %v401, 18
        %v403 = vsub.s32 %v379, %v402
        %v404 = vsub.s32 0, %v403
        %v405 = vsel %vm377, %v404, %v403
        %vm406 = vcmp.lt.s32.totalorder %v347, 0
        %v407 = vsub.s32 0, %v347
        %v408 = vsel %vm406, %v407, %v347
        %v409 = vand.u32 %v408, 65535
        %v410 = vshrl.u32 %v408, 16
        %v412 = vmul.u32 %v409, 14564
        %v413 = vmul.u32 %v409, 58254
        %v414 = vmul.u32 %v410, 14564
        %v415 = vmul.u32 %v410, 58254
        %v416 = vshll.u32 %v413, 16
        %v417 = vshrl.u32 %v413, 16
        %v418 = vshll.u32 %v414, 16
        %v419 = vshrl.u32 %v414, 16
        %vm420 = vc.u32 %v412, %v416
        %v421 = vsel %vm420, 1, 0
        %v422 = vadd.s32 %v412, %v416
        %v423 = vadd.s32 %v415, %v421
        %vm424 = vc.u32 %v422, %v418
        %v425 = vsel %vm424, 1, 0
        %v426 = vadd.s32 %v422, %v418
        %v427 = vadd.s32 %v423, %v425
        %v428 = vadd.s32 %v427, %v417
        %v429 = vadd.s32 %v428, %v419
        %v430 = vshrl.u32 %v429, 4
        %v431 = vmul.u32 %v430, 18
        %v432 = vsub.s32 %v408, %v431
        %v433 = vsub.s32 0, %v432
        %v434 = vsel %vm406, %v433, %v432
        %vm435 = vcmp.ne.s32.totalorder %v376, 0
        %vm436 = vcmp.ne.s32.totalorder %v405, 0
        %vm437 = vcmp.ne.s32.totalorder %v434, 0
        %vm438 = vcmp.lt.s32.totalorder %v376, 0
        %vm439 = vcmp.lt.s32.totalorder %v405, 0
        %vm440 = vcmp.lt.s32.totalorder %v434, 0
        %vm441 = vmand %vm438, %vm435
        %vm442 = vmand %vm439, %vm436
        %vm443 = vmand %vm440, %vm437
        %v444 = vadd.s32 %v376, 18
        %v445 = vadd.s32 %v405, 18
        %v446 = vadd.s32 %v434, 18
        %v447 = vsel %vm441, %v444, %v376
        %v448 = vsel %vm442, %v445, %v405
        %v449 = vsel %vm443, %v446, %v434
        %vm450 = vcmp.lt.s32.totalorder %v447, 16
        %vm451 = vcmp.lt.s32.totalorder %v448, 16
        %vm452 = vcmp.lt.s32.totalorder %v449, 16
        %v453 = vsel %vm450, 1, 0
        %v454 = vsel %vm451, 1, 0
        %v455 = vsel %vm452, 1, 0
        %v456 = vcvt.s32.f32 %v453
        %v457 = vcvt.s32.f32 %v454
        %v458 = vcvt.s32.f32 %v455
        %v459 = vmul.f32 %v302, %v456
        %v460 = vmul.f32 %v322, %v457
        %v461 = vmul.f32 %v342, %v458
        %v462 = vadd.f32 %v459, %v460
        %vm463 = vcmask 261120
        %v464 = vsel %vm463, %v461, 0.0
        %v465 = vadd.f32 %v462, %v464
        %466 = vadd.xlane.f32.xlu0 %v465
        %v467 = vpop.xlane.xlu0 %466
        %v468 = vmul.f32 %v459, %v302
        %v469 = vmul.f32 %v460, %v322
        %v470 = vmul.f32 %v461, %v342
        %v471 = vadd.f32 %v468, %v469
        %v472 = vsel %vm463, %v470, 0.0
        %v473 = vadd.f32 %v471, %v472
        %474 = vadd.xlane.f32.xlu0 %v473
        %v475 = vpop.xlane.xlu0 %474
        %vm476 = vcmask 7168
        %v477 = vsel %vm476, %v467, %v475
        %vm478 = vcmask 15360
        %479 = vst.msk [vmem:[%s176] sm:$0xff] %vm478, %v477
        %p480 = scmp.lt.s32.totalorder %s17, 1
        %s481 = scalar_select %p480, %s17, 1
        %s482 = smul.addr %s481, 8
        %s483 = scalar_lea.vmem %s2, %s482
        // Predicated region
        $region37: #{tpu_custom_call.1} parent=27 // pred_check
          %p484 = pneg %p82
        $region38: #{tpu_custom_call.1} parent=27 // pred_check_branch
          %486 = sbr.rel (%p484) target = $region40
        $region39: #{tpu_custom_call.1} parent=27 // pred_region
          _
        $region40: #{tpu_custom_call.1} parent=27 // pred_fallthru
          _
      $region28: #{tpu_custom_call.1} parent=5 // pred_fallthru
        _
      %p487 = scmp.le.s32.totalorder 2, %s12
      // Predicated region
      $region41: #{tpu_custom_call.1} parent=5 // pred_check
        %p488 = pneg %p487
      $region42: #{tpu_custom_call.1} parent=5 // pred_check_branch
        %490 = sbr.rel (%p488) target = $region44
      $region43: #{tpu_custom_call.1} parent=5 // pred_region
        %s491 = ssub.s32 %s12, 2
        // Predicated region
        $region45: #{tpu_custom_call.1} parent=43 // pred_check
          %p492 = pneg %p88
        $region46: #{tpu_custom_call.1} parent=43 // pred_check_branch
          %494 = sbr.rel (%p492) target = $region48
        $region47: #{tpu_custom_call.1} parent=43 // pred_region
          %p495 = scmp.lt.s32.totalorder %s18, 1
          %s496 = scalar_select %p495, %s18, 1
          %s497 = smul.addr %s496, 8
          %s498 = scalar_lea.vmem %s2, %s497
        $region48: #{tpu_custom_call.1} parent=43 // pred_fallthru
          _
      $region44: #{tpu_custom_call.1} parent=5 // pred_fallthru
        _
    $region6: #{tpu_custom_call.1} parent=1 // loop_footer
      %s16 = sadd.s32 1, %s12
    $region7: #{tpu_custom_call.1} parent=1 // loop_footer_branch
      %11 = sbr.rel target = $region3
    $region8: #{tpu_custom_call.1} parent=1 // loop_exit
      _
    %499 = vsyncpa [#allocation3], 1
    %s500 = scalar_lea.sflag [#allocation3], 1
    %501 = vsyncpa %s500, 1
    %502 = vsyncpa [#allocation5], 1

</llo_original>
